<compile_context>
chip_gen: v6e
topology: v6e:2x2x1
jax: 0.10.0
libtpu: 0.0.40
codegen_flags: <defaults>
</compile_context>

<pallas_src>
import functools

import jax
import jax.numpy as jnp
from jax.experimental import pallas as pl
from jax.experimental.pallas import tpu as pltpu

LANES = 128
SUB_ROWS = 256                        # inner-loop chunk (bounds live vregs)
MAX_TILE_ROWS = 8192                  # 4 MiB per f32 input per buffer
VMEM_INPUT_BUDGET = 16 * 1024 * 1024  # 2 inputs x 2 pipeline buffers
VMEM_LIMIT_BYTES = 32 * 1024 * 1024   # explicit scoped-VMEM limit (safe on v5e/v6e/v7x)


def _round_up(a, b):
    return ((a + b - 1) // b) * b


def _tile_partial_sums(x_ref, t_ref, *, tile_rows, sub_rows, valid_count):
    """(inter_vec, total_vec), each (8,128) f32, for the current tile.

    Streams the (tile_rows, 128) tile in sub_rows-row chunks via lax.fori_loop
    so intermediates stay small regardless of tile size.  valid_count is None
    for a fully-valid tile, else a *static* tile-local element count; elements
    at tile-local index >= valid_count are zeroed (select, NaN-safe).
    """
    def chunk(r0, nrows, inter_v, total_v):
        xc = x_ref[pl.ds(r0, nrows), :].astype(jnp.float32)
        tc = t_ref[pl.ds(r0, nrows), :].astype(jnp.float32)
        # sigmoid as 0.5*tanh(0.5*x)+0.5: single EUP op, no VPU divide.
        s = 0.5 * jnp.tanh(0.5 * xc) + 0.5
        if valid_count is not None:
            # Tile-local indices (<= tile_rows*128 ~ 1M): no i32 overflow.
            row = jax.lax.broadcasted_iota(jnp.int32, (nrows, LANES), 0)
            lane = jax.lax.broadcasted_iota(jnp.int32, (nrows, LANES), 1)
            idx = (r0 + row) * LANES + lane
            ok = idx < valid_count
            s = jnp.where(ok, s, 0.0)    # select: garbage/NaN rows -> exact 0
            tc = jnp.where(ok, tc, 0.0)
        prod = (s * tc).reshape(nrows // 8, 8, LANES)
        tot = (s + tc).reshape(nrows // 8, 8, LANES)
        return inter_v + jnp.sum(prod, axis=0), total_v + jnp.sum(tot, axis=0)

    inter_v = jnp.zeros((8, LANES), jnp.float32)
    total_v = jnp.zeros((8, LANES), jnp.float32)
    nfull = tile_rows // sub_rows
    if nfull > 0:
        def body(c, carry):
            r0 = pl.multiple_of(c * sub_rows, sub_rows)
            return chunk(r0, sub_rows, *carry)
        inter_v, total_v = jax.lax.fori_loop(0, nfull, body, (inter_v, total_v))
    rem = tile_rows - nfull * sub_rows
    if rem > 0:  # static remainder (rem % 8 == 0 by construction)
        inter_v, total_v = chunk(nfull * sub_rows, rem, inter_v, total_v)
    return inter_v, total_v


def _iou_kernel(x_ref, t_ref, inter_ref, total_ref, *, tile_rows, sub_rows,
                tiles_per_split, num_tiles, last_tile_valid, needs_mask):
    k = pl.program_id(1)  # reduction axis: row tiles within this split

    @pl.when(k == 0)
    def _init():
        inter_ref[...] = jnp.zeros((8, LANES), jnp.float32)
        total_ref[...] = jnp.zeros((8, LANES), jnp.float32)

    def accumulate(valid_count):
        iv, tv = _tile_partial_sums(x_ref, t_ref, tile_rows=tile_rows,
                                    sub_rows=sub_rows, valid_count=valid_count)
        inter_ref[...] += iv
        total_ref[...] += tv

    if needs_mask:
        # Only the globally-last tile contains pad zeros / Pallas garbage rows;
        # every other step runs the mask-free fast path.
        t_global = pl.program_id(0) * tiles_per_split + k

        @pl.when(t_global < num_tiles - 1)
        def _fast():
            accumulate(None)

        @pl.when(t_global == num_tiles - 1)
        def _last():
            accumulate(last_tile_valid)
    else:
        accumulate(None)


def iou_loss(inputs, targets, smooth=1.0):
    """Pallas TPU implementation of IOULoss.forward.

    inputs/targets: any identical-size shapes (flattened, like `.view(-1)`).
    Native dtypes are streamed as-is (pass bf16/int8 targets to cut HBM
    traffic); all math is f32.  Returns a scalar float32 loss.
    """
    x = jnp.ravel(inputs)
    t = jnp.ravel(targets)
    n = x.shape[0]
    assert t.shape[0] == n, "inputs and targets must have the same number of elements"

    # Lane-dense (rows, 128) slab with rows % 8 == 0.  Aligned case (n % 1024
    # == 0) is a free reshape; otherwise pad <= 1023 zeros (masked in-kernel).
    n_pad = _round_up(n, 8 * LANES)
    if n_pad != n:
        x = jnp.pad(x, (0, n_pad - n))
        t = jnp.pad(t, (0, n_pad - n))
    rows = n_pad // LANES
    x2 = x.reshape(rows, LANES)
    t2 = t.reshape(rows, LANES)

    # Tile as large as the double-buffered VMEM budget allows (amortizes the
    # ~0.35us/step pipeline overhead); multiple of SUB_ROWS (also satisfies
    # sublane-packing divisibility for bf16/int8 inputs).
    bytes_per_row = LANES * (x2.dtype.itemsize + t2.dtype.itemsize)
    tile_rows = min(MAX_TILE_ROWS, VMEM_INPUT_BUDGET // (2 * bytes_per_row))
    tile_rows = max(SUB_ROWS, (tile_rows // SUB_ROWS) * SUB_ROWS)
    if rows <= tile_rows:
        tile_rows = rows  # single full-extent block
    num_tiles = pl.cdiv(rows, tile_rows)

    # 2-way split of the row-tile range over a leading "parallel" grid axis.
    # On multi-TC chips (v7x) Mosaic shards it across cores; on v5e/v6e it is
    # just two sequential output blocks.  If the tile count is odd, shrink the
    # tile so both halves are equal (no duplicate/out-of-range tiles needed).
    if num_tiles >= 2 and num_tiles % 2 == 1:
        alt = _round_up(pl.cdiv(rows, num_tiles + 1), SUB_ROWS)
        if pl.cdiv(rows, alt) % 2 == 0:
            tile_rows = alt
            num_tiles = pl.cdiv(rows, alt)
    nsplit = 2 if (num_tiles >= 2 and num_tiles % 2 == 0) else 1
    tiles_per_split = num_tiles // nsplit

    tile_elems = tile_rows * LANES
    last_tile_valid = n - (num_tiles - 1) * tile_elems  # static Python int
    needs_mask = last_tile_valid != tile_elems

    kernel = functools.partial(
        _iou_kernel,
        tile_rows=tile_rows,
        sub_rows=min(SUB_ROWS, tile_rows),
        tiles_per_split=tiles_per_split,
        num_tiles=num_tiles,
        last_tile_valid=last_tile_valid,
        needs_mask=needs_mask,
    )

    in_map = lambda s, k: (s * tiles_per_split + k, 0)
    out_map = lambda s, k: (s, 0, 0)

    inter_parts, total_parts = pl.pallas_call(
        kernel,
        out_shape=(jax.ShapeDtypeStruct((nsplit, 8, LANES), jnp.float32),
                   jax.ShapeDtypeStruct((nsplit, 8, LANES), jnp.float32)),
        grid_spec=pltpu.PrefetchScalarGridSpec(
            num_scalar_prefetch=0,
            grid=(nsplit, tiles_per_split),
            in_specs=[
                pl.BlockSpec((tile_rows, LANES), in_map),
                pl.BlockSpec((tile_rows, LANES), in_map),
            ],
            out_specs=[
                pl.BlockSpec((None, 8, LANES), out_map),
                pl.BlockSpec((None, 8, LANES), out_map),
            ],
        ),
        compiler_params=pltpu.CompilerParams(
            dimension_semantics=("parallel", "arbitrary"),
            vmem_limit_bytes=VMEM_LIMIT_BYTES,
        ),
        cost_estimate=pl.CostEstimate(
            flops=6 * n,
            transcendentals=n,
            bytes_accessed=rows * bytes_per_row + 2 * nsplit * 8 * LANES * 4,
        ),
    )(x2, t2)

    # Tiny epilogue (per review): cross-lane reduce of the per-split partial
    # sums + the scalar IoU math, done in plain jnp outside the kernel.
    inter = jnp.sum(inter_parts)
    total = jnp.sum(total_parts)
    union = total - inter
    smooth = jnp.float32(smooth)
    return jnp.float32(1.0) - (inter + smooth) / (union + smooth)


def _reference_iou_loss(inputs, targets, smooth=1.0):
    s = jax.nn.sigmoid(jnp.ravel(inputs).astype(jnp.float32))
    t = jnp.ravel(targets).astype(jnp.float32)
    inter = jnp.sum(s * t)
    total = jnp.sum(s + t)
    union = total - inter
    return 1.0 - (inter + smooth) / (union + smooth)


if __name__ == "__main__":
    key = jax.random.PRNGKey(0)
    k1, k2, k3, k4, k5, k6 = jax.random.split(key, 6)

    # Case 1: segmentation-like logits + binary mask (NCHW), lane-aligned f32.
    x1 = jax.random.normal(k1, (2, 4, 16, 16), dtype=jnp.float32)
    t1 = (jax.random.uniform(k2, (2, 4, 16, 16)) > 0.5).astype(jnp.float32)
    l1 = iou_loss(x1, t1, smooth=1.0)
    jax.block_until_ready(l1)
    r1 = _reference_iou_loss(x1, t1, smooth=1.0)
    assert jnp.allclose(l1, r1, atol=1e-5, rtol=1e-5), (l1, r1)

    # Case 2: unaligned element count + bf16 logits and bf16 (binary) targets
    # (exercises masked-tail path and reduced-precision streaming).
    x2 = jax.random.normal(k3, (3, 5, 7, 11), dtype=jnp.bfloat16)
    t2 = (jax.random.uniform(k4, (3, 5, 7, 11)) > 0.5).astype(jnp.bfloat16)
    l2 = iou_loss(x2, t2, smooth=1.0)
    jax.block_until_ready(l2)
    r2 = _reference_iou_loss(x2, t2, smooth=1.0)
    assert jnp.allclose(l2, r2, atol=1e-4, rtol=1e-4), (l2, r2)

    # Case 3: larger aligned input -> two 8192-row tiles, 2-way "parallel"
    # split grid and the fori_loop sub-chunk path.
    x3 = jax.random.normal(k5, (4, 8, 256, 256), dtype=jnp.float32)
    t3 = (jax.random.uniform(k6, (4, 8, 256, 256)) > 0.5).astype(jnp.float32)
    l3 = iou_loss(x3, t3, smooth=1.0)
    jax.block_until_ready(l3)
    r3 = _reference_iou_loss(x3, t3, smooth=1.0)
    assert jnp.allclose(l3, r3, atol=1e-4, rtol=1e-4), (l3, r3)

    print("KERNEL_OK")
</pallas_src>

<mosaic_0001>
module attributes {stable_mosaic.version = 11 : i64} {
  func.func @_iou_kernel(%arg0: i32, %arg1: i32, %arg2: memref<16x128xf32, #tpu.memory_space<vmem>>, %arg3: memref<16x128xf32, #tpu.memory_space<vmem>>, %arg4: memref<1x8x128xf32, #tpu.memory_space<vmem>>, %arg5: memref<1x8x128xf32, #tpu.memory_space<vmem>>) attributes {dimension_semantics = [#tpu.dimension_semantics<parallel>, #tpu.dimension_semantics<arbitrary>], iteration_bounds = array<i64: 1, 1>, scalar_prefetch = 0 : i64, scratch_operands = 0 : i64, tpu.core_type = #tpu.core_type<tc>, window_params = [{transform_indices = @transform_0, window_bounds = array<i64: 16, 128>}, {transform_indices = @transform_1, window_bounds = array<i64: 16, 128>}, {transform_indices = @transform_2, window_bounds = array<i64: 1, 8, 128>}, {transform_indices = @transform_3, window_bounds = array<i64: 1, 8, 128>}]} {
    %c0_i32 = arith.constant 0 : i32
    %0 = arith.cmpi eq, %arg1, %c0_i32 : i32
    %1 = arith.extui %0 : i1 to i32
    %c0_i32_0 = arith.constant 0 : i32
    %2 = arith.cmpi ne, %1, %c0_i32_0 : i32
    scf.if %2 {
      %cst_21 = arith.constant 0.000000e+00 : f32
      %38 = vector.broadcast %cst_21 : f32 to vector<8x128xf32>
      %c0_22 = arith.constant 0 : index
      %c0_23 = arith.constant 0 : index
      %c0_24 = arith.constant 0 : index
      %39 = vector.load %arg4[%c0_22, %c0_23, %c0_24] : memref<1x8x128xf32, #tpu.memory_space<vmem>>, vector<1x8x128xf32>
      %40 = vector.shape_cast %39 : vector<1x8x128xf32> to vector<8x128xf32>
      %41 = vector.shape_cast %38 : vector<8x128xf32> to vector<1x8x128xf32>
      tpu.vector_store %arg4[%c0_22, %c0_23, %c0_24], %41 {strides = array<i32>} : memref<1x8x128xf32, #tpu.memory_space<vmem>>, vector<1x8x128xf32>,
      %cst_25 = arith.constant 0.000000e+00 : f32
      %42 = vector.broadcast %cst_25 : f32 to vector<8x128xf32>
      %c0_26 = arith.constant 0 : index
      %c0_27 = arith.constant 0 : index
      %c0_28 = arith.constant 0 : index
      %43 = vector.load %arg5[%c0_26, %c0_27, %c0_28] : memref<1x8x128xf32, #tpu.memory_space<vmem>>, vector<1x8x128xf32>
      %44 = vector.shape_cast %43 : vector<1x8x128xf32> to vector<8x128xf32>
      %45 = vector.shape_cast %42 : vector<8x128xf32> to vector<1x8x128xf32>
      tpu.vector_store %arg5[%c0_26, %c0_27, %c0_28], %45 {strides = array<i32>} : memref<1x8x128xf32, #tpu.memory_space<vmem>>, vector<1x8x128xf32>,
    } else {
    }
    %cst = arith.constant 0.000000e+00 : f32
    %3 = vector.broadcast %cst : f32 to vector<8x128xf32>
    %cst_1 = arith.constant 0.000000e+00 : f32
    %4 = vector.broadcast %cst_1 : f32 to vector<8x128xf32>
    %c0_i32_2 = arith.constant 0 : i32
    %c16_i32 = arith.constant 16 : i32
    %5 = arith.muli %c0_i32_2, %c16_i32 : i32
    %6 = tpu.assume_multiple %5, 16 : i32
    %7 = arith.index_cast %6 : i32 to index
    %c0 = arith.constant 0 : index
    %8 = vector.load %arg2[%7, %c0] : memref<16x128xf32, #tpu.memory_space<vmem>>, vector<16x128xf32>
    %9 = arith.index_cast %6 : i32 to index
    %c0_3 = arith.constant 0 : index
    %10 = vector.load %arg3[%9, %c0_3] : memref<16x128xf32, #tpu.memory_space<vmem>>, vector<16x128xf32>
    %cst_4 = arith.constant 5.000000e-01 : f32
    %11 = vector.broadcast %cst_4 : f32 to vector<16x128xf32>
    %12 = arith.mulf %11, %8 : vector<16x128xf32>
    %13 = math.tanh %12 : vector<16x128xf32>
    %cst_5 = arith.constant 5.000000e-01 : f32
    %14 = vector.broadcast %cst_5 : f32 to vector<16x128xf32>
    %15 = arith.mulf %14, %13 : vector<16x128xf32>
    %cst_6 = arith.constant 5.000000e-01 : f32
    %16 = vector.broadcast %cst_6 : f32 to vector<16x128xf32>
    %17 = arith.addf %15, %16 : vector<16x128xf32>
    %18 = arith.mulf %17, %10 : vector<16x128xf32>
    %19 = vector.shape_cast %18 : vector<16x128xf32> to vector<2x8x128xf32>
    %20 = arith.addf %17, %10 : vector<16x128xf32>
    %21 = vector.shape_cast %20 : vector<16x128xf32> to vector<2x8x128xf32>
    %cst_7 = arith.constant dense<0.000000e+00> : vector<8x128xf32>
    %22 = vector.multi_reduction <add>, %19, %cst_7 [0] : vector<2x8x128xf32> to vector<8x128xf32>
    %23 = arith.addf %3, %22 : vector<8x128xf32>
    %cst_8 = arith.constant dense<0.000000e+00> : vector<8x128xf32>
    %24 = vector.multi_reduction <add>, %21, %cst_8 [0] : vector<2x8x128xf32> to vector<8x128xf32>
    %25 = arith.addf %4, %24 : vector<8x128xf32>
    %c1_i32 = arith.constant 1 : i32
    %c0_9 = arith.constant 0 : index
    %c0_10 = arith.constant 0 : index
    %c0_11 = arith.constant 0 : index
    %26 = vector.load %arg4[%c0_9, %c0_10, %c0_11] : memref<1x8x128xf32, #tpu.memory_space<vmem>>, vector<1x8x128xf32>
    %27 = vector.shape_cast %26 : vector<1x8x128xf32> to vector<8x128xf32>
    %28 = arith.addf %27, %23 : vector<8x128xf32>
    %c0_12 = arith.constant 0 : index
    %c0_13 = arith.constant 0 : index
    %c0_14 = arith.constant 0 : index
    %29 = vector.load %arg4[%c0_12, %c0_13, %c0_14] : memref<1x8x128xf32, #tpu.memory_space<vmem>>, vector<1x8x128xf32>
    %30 = vector.shape_cast %29 : vector<1x8x128xf32> to vector<8x128xf32>
    %31 = vector.shape_cast %28 : vector<8x128xf32> to vector<1x8x128xf32>
    tpu.vector_store %arg4[%c0_12, %c0_13, %c0_14], %31 {strides = array<i32>} : memref<1x8x128xf32, #tpu.memory_space<vmem>>, vector<1x8x128xf32>,
    %c0_15 = arith.constant 0 : index
    %c0_16 = arith.constant 0 : index
    %c0_17 = arith.constant 0 : index
    %32 = vector.load %arg5[%c0_15, %c0_16, %c0_17] : memref<1x8x128xf32, #tpu.memory_space<vmem>>, vector<1x8x128xf32>
    %33 = vector.shape_cast %32 : vector<1x8x128xf32> to vector<8x128xf32>
    %34 = arith.addf %33, %25 : vector<8x128xf32>
    %c0_18 = arith.constant 0 : index
    %c0_19 = arith.constant 0 : index
    %c0_20 = arith.constant 0 : index
    %35 = vector.load %arg5[%c0_18, %c0_19, %c0_20] : memref<1x8x128xf32, #tpu.memory_space<vmem>>, vector<1x8x128xf32>
    %36 = vector.shape_cast %35 : vector<1x8x128xf32> to vector<8x128xf32>
    %37 = vector.shape_cast %34 : vector<8x128xf32> to vector<1x8x128xf32>
    tpu.vector_store %arg5[%c0_18, %c0_19, %c0_20], %37 {strides = array<i32>} : memref<1x8x128xf32, #tpu.memory_space<vmem>>, vector<1x8x128xf32>,
    return
  }
  func.func @transform_0(%arg0: i32, %arg1: i32) -> (i32, i32) {
    %c1_i32 = arith.constant 1 : i32
    %0 = arith.muli %arg0, %c1_i32 : i32
    %1 = arith.addi %0, %arg1 : i32
    %c0_i32 = arith.constant 0 : i32
    %c0_i32_0 = arith.constant 0 : i32
    return %1, %c0_i32 : i32, i32
  }
  func.func @transform_1(%arg0: i32, %arg1: i32) -> (i32, i32) {
    %c1_i32 = arith.constant 1 : i32
    %0 = arith.muli %arg0, %c1_i32 : i32
    %1 = arith.addi %0, %arg1 : i32
    %c0_i32 = arith.constant 0 : i32
    %c0_i32_0 = arith.constant 0 : i32
    return %1, %c0_i32 : i32, i32
  }
  func.func @transform_2(%arg0: i32, %arg1: i32) -> (i32, i32, i32) {
    %c0_i32 = arith.constant 0 : i32
    %c0_i32_0 = arith.constant 0 : i32
    %c0_i32_1 = arith.constant 0 : i32
    return %arg0, %c0_i32, %c0_i32_0 : i32, i32, i32
  }
  func.func @transform_3(%arg0: i32, %arg1: i32) -> (i32, i32, i32) {
    %c0_i32 = arith.constant 0 : i32
    %c0_i32_0 = arith.constant 0 : i32
    %c0_i32_1 = arith.constant 0 : i32
    return %arg0, %c0_i32, %c0_i32_0 : i32, i32, i32
  }
}

</mosaic_0001>

<llo_original>
// kernel: tpu_custom_call.1
$region0: #{tpu_custom_call.1}
  #allocation0 [shape = 'u32[]', space=smem, size = 0x4, offset = 0x4, fixed_abs, tag = 'smem constant byte address 0x4 - core index']
  #allocation1 [shape = 'u32[144,128]{1,0:T(1,128)}', space=vmem, size = 0x12000, scoped, tag = 'internal scratch']
  %s0 = inlined_call_operand.hbm [shape: f32[16,128], index: 0, kind: input, shape index: {}]
  %s1 = inlined_call_operand.hbm [shape: f32[16,128], index: 1, kind: input, shape index: {}]
  %s2 = inlined_call_operand.hbm [shape: f32[1,8,128], index: 2, kind: output, shape index: {0}]
  %s3 = inlined_call_operand.hbm [shape: f32[1,8,128], index: 3, kind: output, shape index: {1}]
  %4 = xla_tuple %s2, %s3
  %s5 = sld [smem:[#allocation0]]
  $region38: #{tpu_custom_call.1} parent=0
    _
  %s7 = ssub.s32 1, %s5
  %s8 = scalar_select 0, %s7, %s5
  $region1: #{tpu_custom_call.1} parent=0
    #allocation2 [shape = 'u8[8192]{0}', space=vmem, size = 0x2000, scoped, tag = 'input window, operand 0, single buffered']
    #allocation3 [shape = 's32[1]{0}', space=sflag, size = 0x4, scoped, tag = 'scoped memory for tpu_custom_call.1']
    #allocation4 [shape = 's32[1]{0}', space=sflag, size = 0x4, scoped, tag = 'scoped memory for tpu_custom_call.1']
    #allocation5 [shape = 'u8[8192]{0}', space=vmem, size = 0x2000, scoped, tag = 'input window, operand 1, single buffered']
    #allocation6 [shape = 's32[1]{0}', space=sflag, size = 0x4, scoped, tag = 'scoped memory for tpu_custom_call.1']
    #allocation7 [shape = 'u8[4096]{0}', space=vmem, size = 0x1000, scoped, tag = 'output window, operand 0, single buffered']
    #allocation8 [shape = 'u8[4096]{0}', space=vmem, size = 0x1000, scoped, tag = 'output window, operand 1, single buffered']
    #allocation9 [shape = 's32[1]{0}', space=sflag, size = 0x4, scoped, tag = 'scoped memory for tpu_custom_call.1']
    %9 = vsyncpa [#allocation3], 0
    %10 = vsyncpa [#allocation6], 0
    %11 = vsyncpa [#allocation4], 0
    %12 = vsyncpa [#allocation9], 0
    // Predicated region
    $region2: #{tpu_custom_call.1} parent=1 // pred_check
      _
    $region3: #{tpu_custom_call.1} parent=1 // pred_check_branch
      %14 = sbr.rel (0) target = $region5
    $region4: #{tpu_custom_call.1} parent=1 // pred_region
      %s15 = sadd.s32 0, 0
      %s16 = smul.u32 2, %s15
      %s18 = ssub.s32 256, 256
      %19 = vsyncadd [#allocation3], %s18
      %s20 = smul.addr %s16, 128
      %s21 = scalar_lea.hbm %s0, %s20
      %s22 = sshll.u32 [#allocation2], 4
      %s23 = int_to_ptr.vmem [resolvable:$true] %s22
      %28 = dma.hbm_to_vmem [thread:$0]  %s21, 256, %s23, [#allocation3], 128, 128, 8
    $region5: #{tpu_custom_call.1} parent=1 // pred_fallthru
      _
    // Predicated region
    $region6: #{tpu_custom_call.1} parent=1 // pred_check
      _
    $region7: #{tpu_custom_call.1} parent=1 // pred_check_branch
      %30 = sbr.rel (0) target = $region9
    $region8: #{tpu_custom_call.1} parent=1 // pred_region
      %s31 = sadd.s32 0, 0
      %s32 = smul.u32 2, %s31
      %s34 = ssub.s32 256, 256
      %35 = vsyncadd [#allocation6], %s34
      %s36 = smul.addr %s32, 128
      %s37 = scalar_lea.hbm %s1, %s36
      %s38 = sshll.u32 [#allocation5], 4
      %s39 = int_to_ptr.vmem [resolvable:$true] %s38
      %44 = dma.hbm_to_vmem [thread:$0]  %s37, 256, %s39, [#allocation6], 128, 128, 8
    $region9: #{tpu_custom_call.1} parent=1 // pred_fallthru
      _
    // Predicated region
    $region10: #{tpu_custom_call.1} parent=1 // pred_check
      _
    $region11: #{tpu_custom_call.1} parent=1 // pred_check_branch
      %46 = sbr.rel (0) target = $region13
    $region12: #{tpu_custom_call.1} parent=1 // pred_region
      %47 = dma.done [#allocation3], 256
    $region13: #{tpu_custom_call.1} parent=1 // pred_fallthru
      _
    // Predicated region
    $region14: #{tpu_custom_call.1} parent=1 // pred_check
      _
    $region15: #{tpu_custom_call.1} parent=1 // pred_check_branch
      %49 = sbr.rel (0) target = $region17
    $region16: #{tpu_custom_call.1} parent=1 // pred_region
      %50 = dma.done [#allocation6], 256
    $region17: #{tpu_custom_call.1} parent=1 // pred_fallthru
      _
    %s51 = sadd.s32 0, 0
    %s52 = smul.u32 2, %s51
    %s53 = sadd.s32 0, 0
    %s54 = smul.u32 2, %s53
    %p55 = scmp.eq.s32.totalorder 0, 0
    // Predicated region
    $region18: #{tpu_custom_call.1} parent=1 // pred_check
      %p56 = pneg %p55
    $region19: #{tpu_custom_call.1} parent=1 // pred_check_branch
      %58 = sbr.rel (%p56) target = $region21
    $region20: #{tpu_custom_call.1} parent=1 // pred_region
      %59 = vst [vmem:[#allocation7] sm:$0xff] 0.0
      %60 = vst [vmem:[#allocation8] sm:$0xff] 0.0
    $region21: #{tpu_custom_call.1} parent=1 // pred_fallthru
      _
    %v61 = vld [vmem:[#allocation2] sm:$0xff]
    %v62 = vld [vmem:[#allocation2 + $0x8] sm:$0xff]
    %v63 = vld [vmem:[#allocation5] sm:$0xff]
    %v64 = vld [vmem:[#allocation5 + $0x8] sm:$0xff]
    %v65 = vmul.f32 %v61, 0.5
    %v66 = vmul.f32 %v62, 0.5
    %v67 = vtanh.pop %v65
    %v68 = vtanh.pop %v66
    %v69 = vmul.f32 %v67, 0.5
    %v70 = vmul.f32 %v68, 0.5
    %v71 = vadd.f32 %v69, 0.5
    %v72 = vadd.f32 %v70, 0.5
    %v73 = vmul.f32 %v71, %v63
    %v74 = vmul.f32 %v72, %v64
    %v75 = vadd.f32 %v71, %v63
    %v76 = vadd.f32 %v72, %v64
    %v77 = vadd.f32 %v73, %v74
    %v78 = vadd.f32 %v77, 0.0
    %v79 = vadd.f32 %v75, %v76
    %v80 = vadd.f32 %v79, 0.0
    %v81 = vld [vmem:[#allocation7] sm:$0xff]
    %v82 = vadd.f32 %v81, %v78
    %83 = vst [vmem:[#allocation7] sm:$0xff] %v82
    %v84 = vld [vmem:[#allocation8] sm:$0xff]
    %v85 = vadd.f32 %v84, %v80
    %86 = vst [vmem:[#allocation8] sm:$0xff] %v85
    // Predicated region
    $region22: #{tpu_custom_call.1} parent=1 // pred_check
      _
    $region23: #{tpu_custom_call.1} parent=1 // pred_check_branch
      %88 = sbr.rel (0) target = $region25
    $region24: #{tpu_custom_call.1} parent=1 // pred_region
      %s90 = ssub.s32 128, 128
      %91 = vsyncadd [#allocation4], %s90
      %s93 = sshll.u32 [#allocation7], 4
      %s94 = int_to_ptr.vmem [resolvable:$true] %s93
      %96 = dma.vmem_to_hbm [thread:$0]  %s94, 128, %s2, [#allocation4]
    $region25: #{tpu_custom_call.1} parent=1 // pred_fallthru
      _
    // Predicated region
    $region26: #{tpu_custom_call.1} parent=1 // pred_check
      _
    $region27: #{tpu_custom_call.1} parent=1 // pred_check_branch
      %98 = sbr.rel (0) target = $region29
    $region28: #{tpu_custom_call.1} parent=1 // pred_region
      %s100 = ssub.s32 128, 128
      %101 = vsyncadd [#allocation9], %s100
      %s103 = sshll.u32 [#allocation8], 4
      %s104 = int_to_ptr.vmem [resolvable:$true] %s103
      %106 = dma.vmem_to_hbm [thread:$0]  %s104, 128, %s3, [#allocation9]
    $region29: #{tpu_custom_call.1} parent=1 // pred_fallthru
      _
    // Predicated region
    $region30: #{tpu_custom_call.1} parent=1 // pred_check
      _
    $region31: #{tpu_custom_call.1} parent=1 // pred_check_branch
      %108 = sbr.rel (0) target = $region33
    $region32: #{tpu_custom_call.1} parent=1 // pred_region
      %109 = dma.done [#allocation4], 128
    $region33: #{tpu_custom_call.1} parent=1 // pred_fallthru
      _
    // Predicated region
    $region34: #{tpu_custom_call.1} parent=1 // pred_check
      _
    $region35: #{tpu_custom_call.1} parent=1 // pred_check_branch
      %111 = sbr.rel (0) target = $region37
    $region36: #{tpu_custom_call.1} parent=1 // pred_region
      %112 = dma.done [#allocation9], 128
    $region37: #{tpu_custom_call.1} parent=1 // pred_fallthru
      _
    %113 = vsyncpa [#allocation3], 1
    %114 = vsyncpa [#allocation6], 1
    %115 = vsyncpa [#allocation4], 1
    %116 = vsyncpa [#allocation9], 1

</llo_original>
